<compile_context>
chip_gen: v7x
topology: tpu7x:2x2x1
jax: 0.10.0
libtpu: 0.0.40
codegen_flags: <defaults>
</compile_context>

<pallas_src>
import math

import jax
import jax.numpy as jnp
from jax.experimental import pallas as pl
from jax.experimental.pallas import tpu as pltpu


def _round_up(x, m):
    return -(-int(x) // m) * m


def _row_align(out_dtype):
    itemsize = jnp.dtype(out_dtype).itemsize
    if itemsize >= 4:
        return 8
    if itemsize == 2:
        return 16
    return 32


# ---------------------------------------------------------------------------
# Lane-dense slab kernel (embedding_dim divides 128).
# ---------------------------------------------------------------------------
def _ts_pe_slab_kernel(d_ref, const_ref, out_ref):
    """One (block_rows, 128) slab of the flat row-major output.

    d_ref:     (block_rows, s_per_row)  deltas, s_per_row seq positions / row
    const_ref: (2 + s_per_row, 128)     [div_scaled ; bias ; W_expand]
    out_ref:   (block_rows, 128)
    """
    block_rows = d_ref.shape[0]
    c = const_ref[...]
    div_scaled = c[0:1, :]      # s_per_row * div_term, per lane
    bias = c[1:2, :]            # group*div_term + (pi/2 on cos lanes)
    w_expand = c[2:, :]         # one_hot(group) * w, per lane

    base = pl.program_id(0) * block_rows
    row_idx = (jax.lax.broadcasted_iota(jnp.int32, (block_rows, 128), 0)
               + base).astype(jnp.float32)

    # phi[r, l] = delta[r, l // emb] * w[(l % emb) % half]  -- tiny MXU matmul.
    # Garbage in OOB rows of a partial last block only pollutes rows that are
    # never written back.
    phi = jnp.dot(d_ref[...], w_expand, preferred_element_type=jnp.float32)

    x = row_idx * div_scaled + bias + phi
    # cos(x) == sin(x + pi/2); pi/2 is folded into `bias` on cos lanes, so a
    # single sin pass covers both halves (same EUP count as sin + cos).
    out_ref[...] = jnp.sin(x).astype(out_ref.dtype)


# ---------------------------------------------------------------------------
# Wide fallback kernel (emb >= 128 or 128 % emb != 0).
# ---------------------------------------------------------------------------
def _ts_pe_wide_kernel(d_ref, const_ref, out_ref):
    """One (block_s, emb) tile in the natural layout.

    d_ref:     (block_s, 1)   deltas
    const_ref: (2, half)      row 0 = div_term, row 1 = w
    out_ref:   (block_s, 2*half)
    """
    block_s = d_ref.shape[0]
    half = const_ref.shape[1]
    c = const_ref[...]
    div_row = c[0:1, :]
    w_row = c[1:2, :]

    base = pl.program_id(0) * block_s
    pos = (jax.lax.broadcasted_iota(jnp.int32, (block_s, half), 0)
           + base).astype(jnp.float32)
    x = pos * div_row + d_ref[...] * w_row

    if half % 128 == 0:
        # Both halves are vreg lane-aligned: two direct stores, no concat.
        out_ref[:, :half] = jnp.sin(x).astype(out_ref.dtype)
        out_ref[:, half:] = jnp.cos(x).astype(out_ref.dtype)
    else:
        out_ref[...] = jnp.concatenate(
            [jnp.sin(x), jnp.cos(x)], axis=-1).astype(out_ref.dtype)


# ---------------------------------------------------------------------------
# Wrappers.
# ---------------------------------------------------------------------------
def _slab_path(deltas, w_vec, div_vec, seq_len, half, emb, block_rows,
               out_dtype):
    s_per_row = 128 // emb
    padded_rows = pl.cdiv(seq_len, s_per_row)
    padded_s = int(padded_rows) * s_per_row
    if padded_s != seq_len:
        deltas = jnp.pad(deltas, ((0, padded_s - seq_len), (0, 0)))
    d2 = deltas.reshape(padded_rows, s_per_row)

    # Per-lane constants for the slab layout (flat column c = lane % emb).
    lane = jnp.arange(128)
    col = lane % emb
    freq = col % half
    group = lane // emb
    div_lane = div_vec[freq]                                   # (128,)
    w_lane = w_vec[freq]                                       # (128,)
    phase = jnp.where(col >= half, jnp.float32(math.pi / 2.0), jnp.float32(0.0))
    div_scaled = (div_lane * jnp.float32(s_per_row)).reshape(1, 128)
    bias = (group.astype(jnp.float32) * div_lane + phase).reshape(1, 128)
    onehot = (group[None, :] == jnp.arange(s_per_row)[:, None]).astype(jnp.float32)
    w_expand = onehot * w_lane[None, :]                        # (s_per_row, 128)
    consts = jnp.concatenate([div_scaled, bias, w_expand], axis=0)

    align = _row_align(out_dtype)
    if block_rows is None:
        cap = 4096                                  # ~2 MiB f32 output / step
        two_step = _round_up(pl.cdiv(padded_rows, 2), align)  # >=2 steps (v7x)
        block_rows = max(align, min(cap, two_step))
    block_rows = _round_up(block_rows, align)
    if block_rows >= padded_rows:
        block_rows = int(padded_rows)               # full extent: always legal
    grid = (pl.cdiv(padded_rows, block_rows),)

    out_itemsize = jnp.dtype(out_dtype).itemsize
    cost = pl.CostEstimate(
        flops=int(padded_rows * 128 * (3 + 2 * s_per_row)),
        transcendentals=int(padded_rows * 128),
        bytes_accessed=int(padded_rows * 128 * out_itemsize
                           + padded_s * 4 + consts.size * 4),
    )

    out_slab = pl.pallas_call(
        _ts_pe_slab_kernel,
        out_shape=jax.ShapeDtypeStruct((int(padded_rows), 128), out_dtype),
        grid_spec=pltpu.PrefetchScalarGridSpec(
            num_scalar_prefetch=0,
            grid=grid,
            in_specs=[
                pl.BlockSpec((block_rows, s_per_row), lambda i: (i, 0)),
                pl.BlockSpec((2 + s_per_row, 128), lambda i: (0, 0)),
            ],
            out_specs=pl.BlockSpec((block_rows, 128), lambda i: (i, 0)),
        ),
        compiler_params=pltpu.CompilerParams(
            dimension_semantics=("parallel",)),
        cost_estimate=cost,
    )(d2, consts)

    out = out_slab.reshape(padded_s, emb)
    if padded_s != seq_len:
        out = out[:seq_len]
    return out


def _wide_path(deltas, w_vec, div_vec, seq_len, half, emb, block_s, out_dtype):
    consts = jnp.stack([div_vec, w_vec], axis=0)    # (2, half), one DMA stream

    align = _row_align(out_dtype)
    out_itemsize = jnp.dtype(out_dtype).itemsize
    if block_s is None:
        cap = max(align, (2 * 1024 * 1024) // max(emb * out_itemsize, 1))
        two_step = _round_up(pl.cdiv(seq_len, 2), align)
        block_s = max(align, min(cap, two_step))
    block_s = _round_up(block_s, align)
    if block_s >= seq_len:
        block_s = seq_len                            # full extent: always legal
    grid = (pl.cdiv(seq_len, block_s),)

    cost = pl.CostEstimate(
        flops=int(4 * seq_len * half),
        transcendentals=int(seq_len * emb),
        bytes_accessed=int(seq_len * emb * out_itemsize + seq_len * 4
                           + consts.size * 4),
    )

    return pl.pallas_call(
        _ts_pe_wide_kernel,
        out_shape=jax.ShapeDtypeStruct((seq_len, emb), out_dtype),
        grid_spec=pltpu.PrefetchScalarGridSpec(
            num_scalar_prefetch=0,
            grid=grid,
            in_specs=[
                pl.BlockSpec((block_s, 1), lambda i: (i, 0)),
                pl.BlockSpec((2, half), lambda i: (0, 0)),
            ],
            out_specs=pl.BlockSpec((block_s, emb), lambda i: (i, 0)),
        ),
        compiler_params=pltpu.CompilerParams(
            dimension_semantics=("parallel",)),
        cost_estimate=cost,
    )(deltas, consts)


def time_shifted_positional_encoding(event_times, event_time_deltas, weight,
                                     div_term, *, block_rows=None,
                                     out_dtype=jnp.float32):
    """SAHP time-shifted positional encoding (Pallas TPU).

    event_times:       (S, 1)  only its length is used (matches the module)
    event_time_deltas: (S, 1)
    weight:            (half, 1)  nn.Linear(1, half, bias=False).weight
    div_term:          (half,)
    returns:           (S, 2*half) in `out_dtype` (compute is float32)
    """
    seq_len = int(event_times.shape[0])
    half = int(weight.shape[0])
    emb = 2 * half

    deltas = event_time_deltas.astype(jnp.float32).reshape(seq_len, 1)
    w_vec = weight.astype(jnp.float32).reshape(half)
    div_vec = div_term.astype(jnp.float32).reshape(half)

    if emb <= 128 and 128 % emb == 0:
        return _slab_path(deltas, w_vec, div_vec, seq_len, half, emb,
                          block_rows, out_dtype)
    return _wide_path(deltas, w_vec, div_vec, seq_len, half, emb,
                      block_rows, out_dtype)


def _reference(event_times, event_time_deltas, weight, div_term, position):
    """Pure-JAX reference mirroring the PyTorch forward."""
    seq_len = event_times.shape[0]
    phi = event_time_deltas @ weight.T
    arc = position[:seq_len] * div_term
    return jnp.concatenate([jnp.sin(arc + phi), jnp.cos(arc + phi)], axis=-1)


if __name__ == "__main__":
    key = jax.random.PRNGKey(0)
    k_w, k_d1, k_d2, k_d3, k_w2, k_d4 = jax.random.split(key, 6)

    # ---- Config 1: typical SAHP dims (lane-dense slab path) ----------------
    embedding_dim = 32
    half = embedding_dim // 2
    max_len = 64
    # nn.Linear(1, half, bias=False).weight has shape (half, 1); kaiming bound
    # for fan_in=1 is 1.0.
    weight = jax.random.uniform(k_w, (half, 1), jnp.float32, -1.0, 1.0)
    position = jnp.arange(0, max_len, dtype=jnp.float32)[:, None]
    div_term = jnp.exp(jnp.arange(0, embedding_dim, 2, dtype=jnp.float32)
                       * -(math.log(10000.0) / embedding_dim))

    # Test 1: small sequence, single tile.
    seq_len = 8
    d1 = jax.random.uniform(k_d1, (seq_len, 1), jnp.float32, 0.0, 2.0)
    t1 = jnp.cumsum(d1, axis=0)
    out1 = jax.block_until_ready(
        time_shifted_positional_encoding(t1, d1, weight, div_term))
    ref1 = _reference(t1, d1, weight, div_term, position)
    assert out1.shape == (seq_len, embedding_dim)
    assert jnp.allclose(out1, ref1, atol=1e-4, rtol=1e-4), "mismatch (test 1)"

    # Test 2: multi-tile grid with a partial last block.
    seq_len2 = 40
    d2 = jax.random.uniform(k_d2, (seq_len2, 1), jnp.float32, 0.0, 2.0)
    t2 = jnp.cumsum(d2, axis=0)
    out2 = jax.block_until_ready(
        time_shifted_positional_encoding(t2, d2, weight, div_term,
                                         block_rows=8))
    ref2 = _reference(t2, d2, weight, div_term, position)
    assert out2.shape == (seq_len2, embedding_dim)
    assert jnp.allclose(out2, ref2, atol=1e-4, rtol=1e-4), "mismatch (test 2)"

    # Test 3: seq_len not a multiple of 128/emb (pad + slice), plus bf16 out.
    seq_len3 = 13
    d3 = jax.random.uniform(k_d3, (seq_len3, 1), jnp.float32, 0.0, 2.0)
    t3 = jnp.cumsum(d3, axis=0)
    out3 = jax.block_until_ready(
        time_shifted_positional_encoding(t3, d3, weight, div_term))
    ref3 = _reference(t3, d3, weight, div_term, position)
    assert out3.shape == (seq_len3, embedding_dim)
    assert jnp.allclose(out3, ref3, atol=1e-4, rtol=1e-4), "mismatch (test 3)"

    out3b = jax.block_until_ready(
        time_shifted_positional_encoding(t3, d3, weight, div_term,
                                         out_dtype=jnp.bfloat16))
    assert out3b.dtype == jnp.bfloat16
    assert jnp.allclose(out3b.astype(jnp.float32), ref3,
                        atol=2e-2, rtol=2e-2), "mismatch (test 3, bf16)"

    # Test 4: wide path (emb=256, half=128 -> two lane-aligned stores).
    embedding_dim4 = 256
    half4 = embedding_dim4 // 2
    weight4 = jax.random.uniform(k_w2, (half4, 1), jnp.float32, -1.0, 1.0)
    div_term4 = jnp.exp(jnp.arange(0, embedding_dim4, 2, dtype=jnp.float32)
                        * -(math.log(10000.0) / embedding_dim4))
    seq_len4 = 16
    d4 = jax.random.uniform(k_d4, (seq_len4, 1), jnp.float32, 0.0, 2.0)
    t4 = jnp.cumsum(d4, axis=0)
    out4 = jax.block_until_ready(
        time_shifted_positional_encoding(t4, d4, weight4, div_term4))
    ref4 = _reference(t4, d4, weight4, div_term4, position)
    assert out4.shape == (seq_len4, embedding_dim4)
    assert jnp.allclose(out4, ref4, atol=1e-4, rtol=1e-4), "mismatch (test 4)"

    print("KERNEL_OK")
</pallas_src>

<mosaic_0001>
module attributes {stable_mosaic.version = 11 : i64} {
  func.func @_ts_pe_slab_kernel(%arg0: i32, %arg1: memref<2x4xf32, #tpu.memory_space<vmem>>, %arg2: memref<6x128xf32, #tpu.memory_space<vmem>>, %arg3: memref<2x128xf32, #tpu.memory_space<vmem>>) attributes {dimension_semantics = [#tpu.dimension_semantics<parallel>], iteration_bounds = array<i64: 1>, scalar_prefetch = 0 : i64, scratch_operands = 0 : i64, tpu.core_type = #tpu.core_type<tc>, window_params = [{transform_indices = @transform_0, window_bounds = array<i64: 2, 4>}, {pipeline_mode = #tpu.pipeline_mode<synchronous>, transform_indices = @transform_1, window_bounds = array<i64: 6, 128>}, {transform_indices = @transform_2, window_bounds = array<i64: 2, 128>}]} {
    %c0 = arith.constant 0 : index
    %c0_0 = arith.constant 0 : index
    %0 = vector.load %arg2[%c0, %c0_0] : memref<6x128xf32, #tpu.memory_space<vmem>>, vector<6x128xf32>
    %1 = vector.extract_strided_slice %0 {offsets = [0, 0], sizes = [1, 128], strides = [1, 1]} : vector<6x128xf32> to vector<1x128xf32>
    %2 = vector.extract_strided_slice %0 {offsets = [1, 0], sizes = [1, 128], strides = [1, 1]} : vector<6x128xf32> to vector<1x128xf32>
    %3 = vector.extract_strided_slice %0 {offsets = [2, 0], sizes = [4, 128], strides = [1, 1]} : vector<6x128xf32> to vector<4x128xf32>
    %c2_i32 = arith.constant 2 : i32
    %4 = arith.muli %arg0, %c2_i32 : i32
    %5 = tpu.iota {dimensions = array<i32: 0>} : vector<2x128xi32>
    %6 = vector.broadcast %4 : i32 to vector<2x128xi32>
    %7 = arith.addi %5, %6 : vector<2x128xi32>
    %8 = arith.sitofp %7 : vector<2x128xi32> to vector<2x128xf32>
    %c0_1 = arith.constant 0 : index
    %c0_2 = arith.constant 0 : index
    %9 = vector.load %arg1[%c0_1, %c0_2] : memref<2x4xf32, #tpu.memory_space<vmem>>, vector<2x4xf32>
    %cst = arith.constant dense<0.000000e+00> : vector<2x128xf32>
    %10 = tpu.matmul %9, %3, %cst {dimension_numbers = #tpu.dot_dimension_numbers<[1], [0], [0], [1], [0, 0, 1, 1], [], []>} : vector<2x4xf32>, vector<4x128xf32>, vector<2x128xf32> -> vector<2x128xf32>
    %11 = vector.broadcast %1 : vector<1x128xf32> to vector<2x128xf32>
    %12 = arith.mulf %8, %11 : vector<2x128xf32>
    %13 = vector.broadcast %2 : vector<1x128xf32> to vector<2x128xf32>
    %14 = arith.addf %12, %13 : vector<2x128xf32>
    %15 = arith.addf %14, %10 : vector<2x128xf32>
    %16 = math.sin %15 : vector<2x128xf32>
    %c0_3 = arith.constant 0 : index
    %c0_4 = arith.constant 0 : index
    %17 = vector.load %arg3[%c0_3, %c0_4] : memref<2x128xf32, #tpu.memory_space<vmem>>, vector<2x128xf32>
    tpu.vector_store %arg3[%c0_3, %c0_4], %16 {strides = array<i32>} : memref<2x128xf32, #tpu.memory_space<vmem>>, vector<2x128xf32>,
    return
  }
  func.func @transform_0(%arg0: i32) -> (i32, i32) {
    %c0_i32 = arith.constant 0 : i32
    %c0_i32_0 = arith.constant 0 : i32
    return %arg0, %c0_i32 : i32, i32
  }
  func.func @transform_1(%arg0: i32) -> (i32, i32) {
    %c0_i32 = arith.constant 0 : i32
    %c0_i32_0 = arith.constant 0 : i32
    %c0_i32_1 = arith.constant 0 : i32
    return %c0_i32, %c0_i32_0 : i32, i32
  }
  func.func @transform_2(%arg0: i32) -> (i32, i32) {
    %c0_i32 = arith.constant 0 : i32
    %c0_i32_0 = arith.constant 0 : i32
    return %arg0, %c0_i32 : i32, i32
  }
}

</mosaic_0001>

<llo_original>
// kernel: tpu_custom_call.1
$region0: #{tpu_custom_call.1}
  #allocation0 [shape = 'u32[]', space=smem, size = 0x4, offset = 0x4, fixed_abs, tag = 'smem constant byte address 0x4 - core index']
  #allocation1 [shape = 'u32[144,128]{1,0:T(1,128)}', space=vmem, size = 0x12000, scoped, tag = 'internal scratch']
  %s0 = inlined_call_operand.hbm [shape: f32[2,4], index: 0, kind: input, shape index: {}]
  %s1 = inlined_call_operand.hbm [shape: f32[6,128], index: 1, kind: input, shape index: {}]
  %s2 = inlined_call_operand.hbm [shape: f32[2,128], index: 2, kind: output, shape index: {}]
  %s3 = sld [smem:[#allocation0]]
  $region26: #{tpu_custom_call.1} parent=0
    _
  %s5 = ssub.s32 1, %s3
  %s6 = scalar_select 0, %s5, %s3
  $region1: #{tpu_custom_call.1} parent=0
    #allocation2 [shape = 'u8[1024]{0}', space=vmem, size = 0x400, scoped, tag = 'input window, operand 0, single buffered']
    #allocation3 [shape = 's32[1]{0}', space=sflag, size = 0x4, scoped, tag = 'scoped memory for tpu_custom_call.1']
    #allocation4 [shape = 's32[1]{0}', space=sflag, size = 0x4, scoped, tag = 'scoped memory for tpu_custom_call.1']
    #allocation5 [shape = 'u8[4096]{0}', space=vmem, size = 0x1000, scoped, tag = 'input window, operand 1, single buffered']
    #allocation6 [shape = 's32[1]{0}', space=sflag, size = 0x4, scoped, tag = 'scoped memory for tpu_custom_call.1']
    #allocation7 [shape = 'u8[1024]{0}', space=vmem, size = 0x400, scoped, tag = 'output window, operand 0, single buffered']
    %7 = vsyncpa [#allocation3], 0
    %8 = vsyncpa [#allocation6], 0
    %9 = vsyncpa [#allocation4], 0
    // Predicated region
    $region2: #{tpu_custom_call.1} parent=1 // pred_check
      _
    $region3: #{tpu_custom_call.1} parent=1 // pred_check_branch
      %11 = sbr.rel (0) target = $region5
    $region4: #{tpu_custom_call.1} parent=1 // pred_region
      %s13 = ssub.s32 32, 32
      %14 = vsyncadd [#allocation3], %s13
      %s16 = sshll.u32 [#allocation2], 4
      %s17 = int_to_ptr.vmem [resolvable:$true] %s16
      %19 = dma.hbm_to_vmem [thread:$0]  %s0, 32, %s17, [#allocation3]
    $region5: #{tpu_custom_call.1} parent=1 // pred_fallthru
      _
    // Predicated region
    $region6: #{tpu_custom_call.1} parent=1 // pred_check
      _
    $region7: #{tpu_custom_call.1} parent=1 // pred_check_branch
      %21 = sbr.rel (0) target = $region9
    $region8: #{tpu_custom_call.1} parent=1 // pred_region
      %s23 = ssub.s32 128, 128
      %24 = vsyncadd [#allocation6], %s23
      %s26 = sshll.u32 [#allocation5], 4
      %s27 = int_to_ptr.vmem [resolvable:$true] %s26
      %29 = dma.hbm_to_vmem [thread:$0]  %s1, 128, %s27, [#allocation6]
    $region9: #{tpu_custom_call.1} parent=1 // pred_fallthru
      _
    // Predicated region
    $region10: #{tpu_custom_call.1} parent=1 // pred_check
      _
    $region11: #{tpu_custom_call.1} parent=1 // pred_check_branch
      %31 = sbr.rel (0) target = $region13
    $region12: #{tpu_custom_call.1} parent=1 // pred_region
      %32 = dma.done [#allocation3], 32
    $region13: #{tpu_custom_call.1} parent=1 // pred_fallthru
      _
    // Predicated region
    $region14: #{tpu_custom_call.1} parent=1 // pred_check
      _
    $region15: #{tpu_custom_call.1} parent=1 // pred_check_branch
      %34 = sbr.rel (0) target = $region17
    $region16: #{tpu_custom_call.1} parent=1 // pred_region
      %35 = dma.done [#allocation6], 128
    $region17: #{tpu_custom_call.1} parent=1 // pred_fallthru
      _
    %v36 = vld [vmem:[#allocation5] sm:$0x3f]
    %s37 = smul.u32 0, 2
    %v38 = vlaneseq
    %v39 = vshrl.u32 %v38, 7
    %v40 = vstv %s37
    %v41 = vadd.s32 %v39, %v40
    %v42 = vcvt.s32.f32 %v41
    %v43 = vld [vmem:[#allocation2] sm:$0x3]
    %v45 = vrot.slane %v36, 2
    %vm46 = vcmask 31744
    %v48 = vsel %vm46, %v43, 0
    %vm50 = vcmask 1043456
    %v51 = vsel %vm50, %v45, 0
    %53 = vmatprep.subr.mxu0 0.0
    %54 = vmatpush1.msra.mxu0 %v51
    %55 = vmatprep.subr.mxu0 0.0
    %56 = vmatpush1.msra.mxu0 0.0
    %57 = vmatprep.subr.mxu0 0.0
    %58 = vmatpush1.msra.mxu0 0.0
    %59 = vmatprep.subr.mxu0 0.0
    %60 = vmatpush1.msra.mxu0 0.0
    %61 = vmatprep.subr.mxu0 0.0
    %62 = vmatpush1.msra.mxu0 0.0
    %63 = vmatprep.subr.mxu0 0.0
    %64 = vmatpush1.msra.mxu0 0.0
    %65 = vmatprep.subr.mxu0 0.0
    %66 = vmatpush1.msra.mxu0 0.0
    %67 = vmatprep.subr.mxu0 0.0
    %68 = vmatpush1.msra.mxu0 0.0
    %69 = vmatprep.subr.mxu0 0.0
    %70 = vmatpush1.msra.mxu0 0.0
    %71 = vmatprep.subr.mxu0 0.0
    %72 = vmatpush1.msra.mxu0 0.0
    %73 = vmatprep.subr.mxu0 0.0
    %74 = vmatpush1.msra.mxu0 0.0
    %75 = vmatprep.subr.mxu0 0.0
    %76 = vmatpush1.msra.mxu0 0.0
    %77 = vmatprep.subr.mxu0 0.0
    %78 = vmatpush1.msra.mxu0 0.0
    %79 = vmatprep.subr.mxu0 0.0
    %80 = vmatpush1.msra.mxu0 0.0
    %81 = vmatprep.subr.mxu0 0.0
    %82 = vmatpush1.msra.mxu0 0.0
    %83 = vmatprep.subr.mxu0 0.0
    %84 = vmatpush1.msra.mxu0 0.0
    %85 = vmatprep.subr.mxu0 0.0
    %86 = vmatpush1.msra.mxu0 0.0
    %87 = vmatprep.subr.mxu0 0.0
    %88 = vmatpush1.msra.mxu0 0.0
    %89 = vmatprep.subr.mxu0 0.0
    %90 = vmatpush1.msra.mxu0 0.0
    %91 = vmatprep.subr.mxu0 0.0
    %92 = vmatpush1.msra.mxu0 0.0
    %93 = vmatprep.subr.mxu0 0.0
    %94 = vmatpush1.msra.mxu0 0.0
    %95 = vmatprep.subr.mxu0 0.0
    %96 = vmatpush1.msra.mxu0 0.0
    %97 = vmatprep.subr.mxu0 0.0
    %98 = vmatpush1.msra.mxu0 0.0
    %99 = vmatprep.subr.mxu0 0.0
    %100 = vmatpush1.msra.mxu0 0.0
    %101 = vmatprep.subr.mxu0 0.0
    %102 = vmatpush1.msra.mxu0 0.0
    %103 = vmatprep.subr.mxu0 0.0
    %104 = vmatpush1.msra.mxu0 0.0
    %105 = vmatprep.subr.mxu0 0.0
    %106 = vmatpush1.msra.mxu0 0.0
    %107 = vmatprep.subr.mxu0 0.0
    %108 = vmatpush1.msra.mxu0 0.0
    %109 = vmatprep.subr.mxu0 0.0
    %110 = vmatpush1.msra.mxu0 0.0
    %111 = vmatprep.subr.mxu0 0.0
    %112 = vmatpush1.msra.mxu0 0.0
    %113 = vmatprep.subr.mxu0 0.0
    %114 = vmatpush1.msra.mxu0 0.0
    %115 = vmatprep.subr.mxu0 0.0
    %116 = vmatpush1.msra.mxu0 0.0
    %117 = vmatprep.mubr.f32.mxu0 0.0
    %118 = vmatmul.mubr.f32.gmra.mrb[0].mxu0 %v48
    %v119 = vpop.f32.mrb[0].mxu0
    %v120 = vadd.f32 0.0, %v119
    %v121 = vpop.f32.mrb[0].mxu0
    %122 = vdwg.mxu0
    %v123 = vlaneseq
    %v124 = vshrl.u32 %v123, 7
    %v125 = vsub.s32 0, %v124
    %v126 = vrot.slane %v36, %v125
    %v127 = vmul.f32 %v42, %v126
    %v128 = vlaneseq
    %v129 = vshrl.u32 %v128, 7
    %v130 = vsub.s32 1, %v129
    %v131 = vrot.slane %v36, %v130
    %v132 = vadd.f32 %v127, %v131
    %v133 = vadd.f32 %v132, %v120
    %v134 = vand.u32 2147483647, %v133
    %vm135 = vcmp.le.f32.partialorder %v134, 0.7853982
    %vm136 = vcmp.lt.s32.totalorder %v133, 0
    %v137 = vand.u32 %v133, 2139095040
    %v138 = vshrl.u32 %v137, 23
    %v139 = vsub.s32 %v138, 127
    %v140 = vand.u32 2147483647, %v133
    %v141 = vand.u32 %v140, 8388607
    %v142 = vor.u32 %v141, 8388608
    %v143 = vsub.s32 0, %v142
    %v144 = vadd.s32 %v139, 1
    %vm145 = vcmp.gt.s32.totalorder %v144, 0
    %v146 = vsel %vm145, %v144, 0
    %v147 = vshrl.u32 %v146, 5
    %v148 = vand.u32 %v146, 31
    %v149 = vsub.s32 32, %v148
    %v150 = vshrl.u32 683565275, %v149
    %v151 = vshll.u32 683565275, %v148
    %v152 = vshrl.u32 2475754826, %v149
    %v153 = vor.u32 %v151, %v152
    %v154 = vshll.u32 2475754826, %v148
    %v155 = vshrl.u32 2131351028, %v149
    %v156 = vor.u32 %v154, %v155
    %v157 = vshll.u32 2131351028, %v148
    %v158 = vshrl.u32 2102212464, %v149
    %v159 = vor.u32 %v157, %v158
    %v160 = vshll.u32 2102212464, %v148
    %v161 = vshrl.u32 920167782, %v149
    %v162 = vor.u32 %v160, %v161
    %v163 = vshll.u32 920167782, %v148
    %v164 = vshrl.u32 1326507024, %v149
    %v165 = vor.u32 %v163, %v164
    %vm166 = vcmp.lt.s32.totalorder %v147, 1
    %vm167 = vcmp.lt.s32.totalorder %v147, 2
    %vm168 = vcmp.lt.s32.totalorder %v147, 3
    %vm169 = vcmp.lt.s32.totalorder %v147, 4
    %v170 = vsel %vm166, %v150, %v153
    %v171 = vsel %vm169, %v159, 2102212464
    %v172 = vsel %vm168, %v156, %v171
    %v173 = vsel %vm167, %v170, %v172
    %v174 = vsel %vm166, %v153, %v156
    %v175 = vsel %vm169, %v162, 920167782
    %v176 = vsel %vm168, %v159, %v175
    %v177 = vsel %vm167, %v174, %v176
    %v178 = vsel %vm166, %v156, %v159
    %v179 = vsel %vm169, %v165, 1326507024
    %v180 = vsel %vm168, %v162, %v179
    %v181 = vsel %vm167, %v178, %v180
    %v182 = vshll.u32 %v142, 8
    %v183 = vmul.u32.u64.compose %v182, %v181
    %v184 = vextract.low.u32 %v183
    %v185 = vextract.high.u32 %v183
    %v186 = vmul.u32.u64.compose %v182, %v177
    %v187 = vextract.low.u32 %v186
    %v188 = vextract.high.u32 %v186
    %v189 = vmul.u32 %v182, %v173
    %v190 = vadd.s32 %v185, %v187
    %vm191 = vc.u32 %v185, %v187
    %v192 = vadd.s32 %v188, 1
    %v193 = vsel %vm191, %v192, %v188
    %v194 = vadd.s32 %v189, %v193
    %v195 = vadd.s32 %v194, 536870912
    %v196 = vshrl.u32 %v195, 30
    %v197 = vshll.u32 %v196, 30
    %v198 = vsub.s32 %v194, %v197
    %vm199 = vcmp.lt.s32.totalorder %v198, 0
    %v200 = vsub.s32 0, %v198
    %v201 = vsel %vm199, %v200, %v198
    %v202 = vclz %v201
    %v203 = vsub.s32 %v202, 2
    %vm204 = vcmp.gt.s32.totalorder 0, %v203
    %v205 = vsel %vm204, 0, %v203
    %v206 = vsub.s32 32, %v205
    %v207 = vshll.u32 %v198, %v205
    %v208 = vshrl.u32 %v190, %v206
    %v209 = vor.u32 %v207, %v208
    %v210 = vsub.s32 4294967266, %v205
    %v211 = vadd.s32 %v210, 127
    %v212 = vshll.u32 %v211, 23
    %v213 = vor.u32 4788187, %v212
    %v214 = vand.u32 2147483647, %v213
    %v216 = vcvt.s32.f32 %v209
    %v217 = vmul.f32 %v216, %v214
    %v218 = vxor.u32 %v217, 2147483648
    %v219 = vsel %vm136, %v218, %v217
    %v220 = vsub.s32 4, %v196
    %v221 = vsel %vm136, %v220, %v196
    %v222 = vsel %vm135, %v133, %v219
    %v223 = vsel %vm135, 0, %v221
    %v224 = vcosq.f32.pop %v222
    %v225 = vsinq.f32.pop %v222
    %vm226 = vweird.f32 %v133
    %v227 = vadd.s32 %v223, 3
    %v228 = vand.u32 %v227, 3
    %vm229 = vcmp.lt.s32.totalorder %v228, 2
    %vm230 = vcmp.eq.s32.totalorder %v228, 0
    %v231 = vxor.u32 %v225, 2147483648
    %v232 = vsel %vm230, %v224, %v231
    %vm233 = vcmp.eq.s32.totalorder %v228, 2
    %v234 = vxor.u32 %v224, 2147483648
    %v235 = vsel %vm233, %v234, %v225
    %v236 = vsel %vm229, %v232, %v235
    %v237 = vsel %vm226, nan, %v236
    %238 = vst [vmem:[#allocation7] sm:$0x3] %v237
    // Predicated region
    $region18: #{tpu_custom_call.1} parent=1 // pred_check
      _
    $region19: #{tpu_custom_call.1} parent=1 // pred_check_branch
      %240 = sbr.rel (0) target = $region21
    $region20: #{tpu_custom_call.1} parent=1 // pred_region
      %s242 = ssub.s32 32, 32
      %243 = vsyncadd [#allocation4], %s242
      %s245 = sshll.u32 [#allocation7], 4
      %s246 = int_to_ptr.vmem [resolvable:$true] %s245
      %248 = dma.vmem_to_hbm [thread:$0]  %s246, 32, %s2, [#allocation4]
    $region21: #{tpu_custom_call.1} parent=1 // pred_fallthru
      _
    // Predicated region
    $region22: #{tpu_custom_call.1} parent=1 // pred_check
      _
    $region23: #{tpu_custom_call.1} parent=1 // pred_check_branch
      %250 = sbr.rel (0) target = $region25
    $region24: #{tpu_custom_call.1} parent=1 // pred_region
      %251 = dma.done [#allocation4], 32
    $region25: #{tpu_custom_call.1} parent=1 // pred_fallthru
      _
    %252 = vsyncpa [#allocation3], 1
    %253 = vsyncpa [#allocation6], 1
    %254 = vsyncpa [#allocation4], 1

</llo_original>
